<compile_context>
chip_gen: v7x
topology: tpu7x:2x2x1
jax: 0.10.0
libtpu: 0.0.40
codegen_flags: <defaults>
</compile_context>

<pallas_src>
import functools

import jax
import jax.numpy as jnp
from jax.experimental import pallas as pl
from jax.experimental.pallas import tpu as pltpu


def _round_up(x, m):
    return (x + m - 1) // m * m


def _vmem_limit_bytes():
    """Generation-aware VMEM limit: ~48 MiB on v7x (64 MiB/TC), ~112 MiB on v5e/v6e."""
    try:
        cap = pltpu.get_tpu_info().vmem_capacity_bytes
    except Exception:
        cap = 64 << 20  # assume the smallest (v7x) per-TensorCore VMEM
    return int(min(cap - (16 << 20), 112 << 20))


def _pick_block_rows(np_rows, hp, *, x_bytes, w_bytes, vmem_budget,
                     max_rows=1024, io_buffers=2):
    """Largest row-tile (multiple of 8, divides np_rows) that fits the VMEM budget."""
    # Resident (single-buffered) params: Hp x Hp weight + a_2 / b_2 / linear bias.
    resident = hp * hp * w_bytes + 3 * hp * 4
    avail = max(vmem_budget - resident, 1 << 20)
    # Per row: pipelined x + out tiles (io_buffers each, in the I/O dtype) plus
    # ~4 f32-wide in-kernel intermediates (x_f32, centered, y, bf16 staging).
    per_row = io_buffers * 2 * hp * x_bytes + 4 * hp * 4
    cap = max(8, min(max_rows, avail // per_row))
    # Keep >= 4 row-tiles when there is enough work so megacore sharding
    # (dimension_semantics=("parallel",)) has something to split on v7x.
    if np_rows >= 64:
        cap = min(cap, max(8, np_rows // 4))
    cap = max(8, (cap // 8) * 8)
    # Largest tm = 8*d with d | (np_rows/8) and tm <= cap  -> no extra row padding.
    m = np_rows // 8
    best = 1
    i = 1
    while i * i <= m:
        if m % i == 0:
            for d in (i, m // i):
                if 8 * d <= cap and d > best:
                    best = d
        i += 1
    return int(min(8 * best, np_rows))


def _sublayer_connection_kernel(x_ref, a_ref, b_ref, w_ref, wb_ref, o_ref, *,
                                eps, feat, feat_padded, approx_reciprocal):
    x = x_ref[...].astype(jnp.float32)                          # (tm, Hp)

    # --- LayerNorm (torch semantics: unbiased std, eps added to the std) -----
    mean = jnp.sum(x, axis=-1, keepdims=True) * (1.0 / feat)
    d = x - mean
    if feat_padded != feat:                                     # mask padded lanes
        lane = jax.lax.broadcasted_iota(jnp.int32, (1, feat_padded), 1)
        d = jnp.where(lane < feat, d, 0.0)
    var = jnp.sum(d * d, axis=-1, keepdims=True) * (1.0 / (feat - 1))
    denom = jnp.sqrt(var) + eps
    if approx_reciprocal:
        inv = pl.reciprocal(denom, approx=True)                 # EUP slot, ~free
    else:
        inv = 1.0 / denom
    scale = a_ref[...].astype(jnp.float32) * inv                # fold gain into scale
    normed = d * scale + b_ref[...].astype(jnp.float32)

    # --- sublayer: Linear(H, H) on the MXU (bf16 operands, f32 accumulate) ---
    y = jnp.dot(normed.astype(w_ref.dtype), w_ref[...],
                preferred_element_type=jnp.float32)
    y = y + wb_ref[...].astype(jnp.float32)

    # --- dropout (eval mode = identity) + residual ----------------------------
    # TODO(synk): training-mode dropout would need pltpu.prng_seed/prng_random_bits masking.
    o_ref[...] = (x + y).astype(o_ref.dtype)


def sublayer_connection(x, a_2, b_2, w, w_b, *, eps=1e-6,
                        matmul_dtype=jnp.bfloat16,
                        approx_reciprocal=False,
                        io_buffer_count=2):
    """x: (B, S, H). Returns (B, S, H) = x + Linear(LayerNorm(x)) (eval-mode dropout)."""
    B, S, H = x.shape
    N = B * S

    Hp = _round_up(H, 128)                       # lane-dense last dim
    Np = _round_up(N, 8)                         # sublane-aligned rows only

    w_dtype = jnp.dtype(matmul_dtype) if matmul_dtype is not None else jnp.dtype(w.dtype)
    x_bytes = jnp.dtype(x.dtype).itemsize
    vmem_limit = _vmem_limit_bytes()
    tm = _pick_block_rows(Np, Hp, x_bytes=x_bytes, w_bytes=w_dtype.itemsize,
                          vmem_budget=vmem_limit - (8 << 20),
                          io_buffers=io_buffer_count)

    # Flatten; pad only when the shape is not already (8,128)-aligned.
    needs_pad = (Np != N) or (Hp != H)
    x2 = x.reshape(N, H)
    if needs_pad:
        x2 = jnp.pad(x2, ((0, Np - N), (0, Hp - H)))
    # Zero-padded gain/bias/weight keep padded lanes of the output exactly zero.
    a2 = jnp.pad(a_2.astype(jnp.float32), (0, Hp - H)).reshape(1, Hp)
    b2 = jnp.pad(b_2.astype(jnp.float32), (0, Hp - H)).reshape(1, Hp)
    wp = jnp.pad(w, ((0, Hp - H), (0, Hp - H))).astype(w_dtype)
    wbp = jnp.pad(w_b.astype(jnp.float32), (0, Hp - H)).reshape(1, Hp)

    kernel = functools.partial(_sublayer_connection_kernel, eps=eps, feat=H,
                               feat_padded=Hp, approx_reciprocal=approx_reciprocal)

    cost = pl.CostEstimate(
        flops=2 * N * H * H + 8 * N * H,
        transcendentals=2 * N,
        bytes_accessed=2 * N * H * x_bytes + H * H * w_dtype.itemsize + 3 * H * 4,
    )

    def build(single_buffer_params):
        pm = dict(pipeline_mode=pl.Buffered(1)) if single_buffer_params else {}
        io_pm = (dict(pipeline_mode=pl.Buffered(io_buffer_count))
                 if io_buffer_count != 2 else {})
        return pl.pallas_call(
            kernel,
            out_shape=jax.ShapeDtypeStruct((Np, Hp), x.dtype),
            grid_spec=pl.GridSpec(
                grid=(Np // tm,),
                in_specs=[
                    pl.BlockSpec((tm, Hp), lambda i: (i, 0), **io_pm),  # x (pipelined)
                    pl.BlockSpec((1, Hp), lambda i: (0, 0), **pm),      # a_2 (resident)
                    pl.BlockSpec((1, Hp), lambda i: (0, 0), **pm),      # b_2 (resident)
                    pl.BlockSpec((Hp, Hp), lambda i: (0, 0), **pm),     # linear weight
                    pl.BlockSpec((1, Hp), lambda i: (0, 0), **pm),      # linear bias
                ],
                out_specs=pl.BlockSpec((tm, Hp), lambda i: (i, 0), **io_pm),
            ),
            compiler_params=pltpu.CompilerParams(
                dimension_semantics=("parallel",),
                vmem_limit_bytes=vmem_limit,
            ),
            cost_estimate=cost,
        )

    # TODO(synk): for very large H (Hp^2 * w_bytes > ~half of per-TC VMEM, e.g.
    # H >= ~2048 on v7x) the weight should be tiled over output columns with a
    # second "arbitrary" grid axis instead of being kept fully resident.
    try:
        out = build(True)(x2, a2, b2, wp, wbp)
    except Exception:
        # Fallback for jax versions without Buffered(1) param pipelining.
        out = build(False)(x2, a2, b2, wp, wbp)

    if needs_pad:
        out = out[:N, :H]
    return out.reshape(B, S, H)


def _reference(x, a_2, b_2, w, w_b, eps=1e-6):
    mean = jnp.mean(x, axis=-1, keepdims=True)
    var = jnp.sum((x - mean) ** 2, axis=-1, keepdims=True) / (x.shape[-1] - 1)
    std = jnp.sqrt(var)
    normed = a_2 * (x - mean) / (std + eps) + b_2
    return x + (normed @ w + w_b)


if __name__ == "__main__":
    B, S, H = 2, 8, 32
    key = jax.random.PRNGKey(0)
    kx, kw, kb = jax.random.split(key, 3)

    x = jax.random.normal(kx, (B, S, H), dtype=jnp.float32)

    # LayerNorm parameters exactly as in __init__: ones / zeros.
    a_2 = jnp.ones((H,), dtype=jnp.float32)
    b_2 = jnp.zeros((H,), dtype=jnp.float32)

    # Deterministic Linear(H, H) sublayer parameters.
    w = jax.random.normal(kw, (H, H), dtype=jnp.float32) * 0.05
    w_b = jax.random.normal(kb, (H,), dtype=jnp.float32) * 0.05

    out = sublayer_connection(x, a_2, b_2, w, w_b)
    out = jax.block_until_ready(out)

    ref = _reference(x, a_2, b_2, w, w_b)
    assert out.shape == (B, S, H)
    # Tolerance accounts for bf16 MXU operands (f32 accumulation).
    assert jnp.allclose(out, ref, atol=1e-2, rtol=1e-2), "mismatch vs reference"

    print("KERNEL_OK")
</pallas_src>

<mosaic_0001>
module attributes {stable_mosaic.version = 11 : i64} {
  func.func @_sublayer_connection_kernel(%arg0: i32, %arg1: memref<16x128xf32, #tpu.memory_space<vmem>>, %arg2: memref<1x128xf32, #tpu.memory_space<vmem>>, %arg3: memref<1x128xf32, #tpu.memory_space<vmem>>, %arg4: memref<128x128xbf16, #tpu.memory_space<vmem>>, %arg5: memref<1x128xf32, #tpu.memory_space<vmem>>, %arg6: memref<16x128xf32, #tpu.memory_space<vmem>>) attributes {dimension_semantics = [#tpu.dimension_semantics<parallel>], iteration_bounds = array<i64: 1>, scalar_prefetch = 0 : i64, scratch_operands = 0 : i64, tpu.core_type = #tpu.core_type<tc>, window_params = [{transform_indices = @transform_0, window_bounds = array<i64: 16, 128>}, {pipeline_mode = #tpu.pipeline_mode<synchronous>, transform_indices = @transform_1, window_bounds = array<i64: 1, 128>}, {pipeline_mode = #tpu.pipeline_mode<synchronous>, transform_indices = @transform_2, window_bounds = array<i64: 1, 128>}, {pipeline_mode = #tpu.pipeline_mode<synchronous>, transform_indices = @transform_3, window_bounds = array<i64: 128, 128>}, {pipeline_mode = #tpu.pipeline_mode<synchronous>, transform_indices = @transform_4, window_bounds = array<i64: 1, 128>}, {transform_indices = @transform_5, window_bounds = array<i64: 16, 128>}]} {
    %c0 = arith.constant 0 : index
    %c0_0 = arith.constant 0 : index
    %0 = vector.load %arg1[%c0, %c0_0] : memref<16x128xf32, #tpu.memory_space<vmem>>, vector<16x128xf32>
    %cst = arith.constant dense<0.000000e+00> : vector<16xf32>
    %1 = vector.multi_reduction <add>, %0, %cst [1] : vector<16x128xf32> to vector<16xf32>
    %2 = vector.shape_cast %1 : vector<16xf32> to vector<16x1xf32>
    %cst_1 = arith.constant 3.125000e-02 : f32
    %3 = vector.broadcast %cst_1 : f32 to vector<16x1xf32>
    %4 = arith.mulf %2, %3 : vector<16x1xf32>
    %5 = vector.broadcast %4 : vector<16x1xf32> to vector<16x128xf32>
    %6 = arith.subf %0, %5 : vector<16x128xf32>
    %7 = tpu.iota {dimensions = array<i32: 1>} : vector<1x128xi32>
    %c32_i32 = arith.constant 32 : i32
    %8 = vector.broadcast %c32_i32 : i32 to vector<1x128xi32>
    %9 = arith.cmpi slt, %7, %8 : vector<1x128xi32>
    %cst_2 = arith.constant 0.000000e+00 : f32
    %10 = vector.shape_cast %9 : vector<1x128xi1> to vector<1x128xi1>
    %11 = vector.broadcast %10 : vector<1x128xi1> to vector<16x128xi1>
    %12 = vector.broadcast %cst_2 : f32 to vector<16x128xf32>
    %13 = arith.select %11, %6, %12 : vector<16x128xi1>, vector<16x128xf32>
    %14 = arith.mulf %13, %13 : vector<16x128xf32>
    %cst_3 = arith.constant dense<0.000000e+00> : vector<16xf32>
    %15 = vector.multi_reduction <add>, %14, %cst_3 [1] : vector<16x128xf32> to vector<16xf32>
    %16 = vector.shape_cast %15 : vector<16xf32> to vector<16x1xf32>
    %cst_4 = arith.constant 0.0322580636 : f32
    %17 = vector.broadcast %cst_4 : f32 to vector<16x1xf32>
    %18 = arith.mulf %16, %17 : vector<16x1xf32>
    %19 = math.sqrt %18 : vector<16x1xf32>
    %cst_5 = arith.constant 9.99999997E-7 : f32
    %20 = vector.broadcast %cst_5 : f32 to vector<16x1xf32>
    %21 = arith.addf %19, %20 : vector<16x1xf32>
    %cst_6 = arith.constant 1.000000e+00 : f32
    %22 = vector.broadcast %cst_6 : f32 to vector<16x1xf32>
    %23 = arith.divf %22, %21 : vector<16x1xf32>
    %c0_7 = arith.constant 0 : index
    %c0_8 = arith.constant 0 : index
    %24 = vector.load %arg2[%c0_7, %c0_8] : memref<1x128xf32, #tpu.memory_space<vmem>>, vector<1x128xf32>
    %25 = vector.broadcast %24 : vector<1x128xf32> to vector<16x128xf32>
    %26 = vector.broadcast %23 : vector<16x1xf32> to vector<16x128xf32>
    %27 = arith.mulf %25, %26 : vector<16x128xf32>
    %28 = arith.mulf %13, %27 : vector<16x128xf32>
    %c0_9 = arith.constant 0 : index
    %c0_10 = arith.constant 0 : index
    %29 = vector.load %arg3[%c0_9, %c0_10] : memref<1x128xf32, #tpu.memory_space<vmem>>, vector<1x128xf32>
    %30 = vector.broadcast %29 : vector<1x128xf32> to vector<16x128xf32>
    %31 = arith.addf %28, %30 : vector<16x128xf32>
    %32 = arith.truncf %31 : vector<16x128xf32> to vector<16x128xbf16>
    %c0_11 = arith.constant 0 : index
    %c0_12 = arith.constant 0 : index
    %33 = vector.load %arg4[%c0_11, %c0_12] : memref<128x128xbf16, #tpu.memory_space<vmem>>, vector<128x128xbf16>
    %cst_13 = arith.constant dense<0.000000e+00> : vector<16x128xf32>
    %34 = tpu.matmul %32, %33, %cst_13 {dimension_numbers = #tpu.dot_dimension_numbers<[1], [0], [0], [1], [0, 0, 1, 1], [], []>} : vector<16x128xbf16>, vector<128x128xbf16>, vector<16x128xf32> -> vector<16x128xf32>
    %c0_14 = arith.constant 0 : index
    %c0_15 = arith.constant 0 : index
    %35 = vector.load %arg5[%c0_14, %c0_15] : memref<1x128xf32, #tpu.memory_space<vmem>>, vector<1x128xf32>
    %36 = vector.broadcast %35 : vector<1x128xf32> to vector<16x128xf32>
    %37 = arith.addf %34, %36 : vector<16x128xf32>
    %38 = arith.addf %0, %37 : vector<16x128xf32>
    %c0_16 = arith.constant 0 : index
    %c0_17 = arith.constant 0 : index
    %39 = vector.load %arg6[%c0_16, %c0_17] : memref<16x128xf32, #tpu.memory_space<vmem>>, vector<16x128xf32>
    tpu.vector_store %arg6[%c0_16, %c0_17], %38 {strides = array<i32>} : memref<16x128xf32, #tpu.memory_space<vmem>>, vector<16x128xf32>,
    return
  }
  func.func @transform_0(%arg0: i32) -> (i32, i32) {
    %c0_i32 = arith.constant 0 : i32
    %c0_i32_0 = arith.constant 0 : i32
    return %arg0, %c0_i32 : i32, i32
  }
  func.func @transform_1(%arg0: i32) -> (i32, i32) {
    %c0_i32 = arith.constant 0 : i32
    %c0_i32_0 = arith.constant 0 : i32
    %c0_i32_1 = arith.constant 0 : i32
    return %c0_i32, %c0_i32_0 : i32, i32
  }
  func.func @transform_2(%arg0: i32) -> (i32, i32) {
    %c0_i32 = arith.constant 0 : i32
    %c0_i32_0 = arith.constant 0 : i32
    %c0_i32_1 = arith.constant 0 : i32
    return %c0_i32, %c0_i32_0 : i32, i32
  }
  func.func @transform_3(%arg0: i32) -> (i32, i32) {
    %c0_i32 = arith.constant 0 : i32
    %c0_i32_0 = arith.constant 0 : i32
    %c0_i32_1 = arith.constant 0 : i32
    return %c0_i32, %c0_i32_0 : i32, i32
  }
  func.func @transform_4(%arg0: i32) -> (i32, i32) {
    %c0_i32 = arith.constant 0 : i32
    %c0_i32_0 = arith.constant 0 : i32
    %c0_i32_1 = arith.constant 0 : i32
    return %c0_i32, %c0_i32_0 : i32, i32
  }
  func.func @transform_5(%arg0: i32) -> (i32, i32) {
    %c0_i32 = arith.constant 0 : i32
    %c0_i32_0 = arith.constant 0 : i32
    return %arg0, %c0_i32 : i32, i32
  }
}

module attributes {stable_mosaic.version = 11 : i64} {
  func.func @_sublayer_connection_kernel(%arg0: i32, %arg1: memref<16x128xf32, #tpu.memory_space<vmem>>, %arg2: memref<1x128xf32, #tpu.memory_space<vmem>>, %arg3: memref<1x128xf32, #tpu.memory_space<vmem>>, %arg4: memref<128x128xbf16, #tpu.memory_space<vmem>>, %arg5: memref<1x128xf32, #tpu.memory_space<vmem>>, %arg6: memref<16x128xf32, #tpu.memory_space<vmem>>) attributes {dimension_semantics = [#tpu.dimension_semantics<parallel>], iteration_bounds = array<i64: 1>, scalar_prefetch = 0 : i64, scratch_operands = 0 : i64, tpu.core_type = #tpu.core_type<tc>, window_params = [{transform_indices = @transform_0, window_bounds = array<i64: 16, 128>}, {pipeline_mode = #tpu.pipeline_mode<synchronous>, transform_indices = @transform_1, window_bounds = array<i64: 1, 128>}, {pipeline_mode = #tpu.pipeline_mode<synchronous>, transform_indices = @transform_2, window_bounds = array<i64: 1, 128>}, {pipeline_mode = #tpu.pipeline_mode<synchronous>, transform_indices = @transform_3, window_bounds = array<i64: 128, 128>}, {pipeline_mode = #tpu.pipeline_mode<synchronous>, transform_indices = @transform_4, window_bounds = array<i64: 1, 128>}, {transform_indices = @transform_5, window_bounds = array<i64: 16, 128>}]} {
    %c0 = arith.constant 0 : index
    %c0_0 = arith.constant 0 : index
    %0 = vector.load %arg1[%c0, %c0_0] : memref<16x128xf32, #tpu.memory_space<vmem>>, vector<16x128xf32>
    %cst = arith.constant dense<0.000000e+00> : vector<16xf32>
    %1 = vector.multi_reduction <add>, %0, %cst [1] : vector<16x128xf32> to vector<16xf32>
    %2 = vector.shape_cast %1 : vector<16xf32> to vector<16x1xf32>
    %cst_1 = arith.constant 3.125000e-02 : f32
    %3 = vector.broadcast %cst_1 : f32 to vector<16x1xf32>
    %4 = arith.mulf %2, %3 : vector<16x1xf32>
    %5 = vector.broadcast %4 : vector<16x1xf32> to vector<16x128xf32>
    %6 = arith.subf %0, %5 : vector<16x128xf32>
    %7 = tpu.iota {dimensions = array<i32: 1>} : vector<1x128xi32>
    %c32_i32 = arith.constant 32 : i32
    %8 = vector.broadcast %c32_i32 : i32 to vector<1x128xi32>
    %9 = arith.cmpi slt, %7, %8 : vector<1x128xi32>
    %cst_2 = arith.constant 0.000000e+00 : f32
    %10 = vector.shape_cast %9 : vector<1x128xi1> to vector<1x128xi1>
    %11 = vector.broadcast %10 : vector<1x128xi1> to vector<16x128xi1>
    %12 = vector.broadcast %cst_2 : f32 to vector<16x128xf32>
    %13 = arith.select %11, %6, %12 : vector<16x128xi1>, vector<16x128xf32>
    %14 = arith.mulf %13, %13 : vector<16x128xf32>
    %cst_3 = arith.constant dense<0.000000e+00> : vector<16xf32>
    %15 = vector.multi_reduction <add>, %14, %cst_3 [1] : vector<16x128xf32> to vector<16xf32>
    %16 = vector.shape_cast %15 : vector<16xf32> to vector<16x1xf32>
    %cst_4 = arith.constant 0.0322580636 : f32
    %17 = vector.broadcast %cst_4 : f32 to vector<16x1xf32>
    %18 = arith.mulf %16, %17 : vector<16x1xf32>
    %19 = math.sqrt %18 : vector<16x1xf32>
    %cst_5 = arith.constant 9.99999997E-7 : f32
    %20 = vector.broadcast %cst_5 : f32 to vector<16x1xf32>
    %21 = arith.addf %19, %20 : vector<16x1xf32>
    %cst_6 = arith.constant 1.000000e+00 : f32
    %22 = vector.broadcast %cst_6 : f32 to vector<16x1xf32>
    %23 = arith.divf %22, %21 : vector<16x1xf32>
    %c0_7 = arith.constant 0 : index
    %c0_8 = arith.constant 0 : index
    %24 = vector.load %arg2[%c0_7, %c0_8] : memref<1x128xf32, #tpu.memory_space<vmem>>, vector<1x128xf32>
    %25 = vector.broadcast %24 : vector<1x128xf32> to vector<16x128xf32>
    %26 = vector.broadcast %23 : vector<16x1xf32> to vector<16x128xf32>
    %27 = arith.mulf %25, %26 : vector<16x128xf32>
    %28 = arith.mulf %13, %27 : vector<16x128xf32>
    %c0_9 = arith.constant 0 : index
    %c0_10 = arith.constant 0 : index
    %29 = vector.load %arg3[%c0_9, %c0_10] : memref<1x128xf32, #tpu.memory_space<vmem>>, vector<1x128xf32>
    %30 = vector.broadcast %29 : vector<1x128xf32> to vector<16x128xf32>
    %31 = arith.addf %28, %30 : vector<16x128xf32>
    %32 = arith.truncf %31 : vector<16x128xf32> to vector<16x128xbf16>
    %c0_11 = arith.constant 0 : index
    %c0_12 = arith.constant 0 : index
    %33 = vector.load %arg4[%c0_11, %c0_12] : memref<128x128xbf16, #tpu.memory_space<vmem>>, vector<128x128xbf16>
    %cst_13 = arith.constant dense<0.000000e+00> : vector<16x128xf32>
    %34 = tpu.matmul %32, %33, %cst_13 {dimension_numbers = #tpu.dot_dimension_numbers<[1], [0], [0], [1], [0, 0, 1, 1], [], []>} : vector<16x128xbf16>, vector<128x128xbf16>, vector<16x128xf32> -> vector<16x128xf32>
    %c0_14 = arith.constant 0 : index
    %c0_15 = arith.constant 0 : index
    %35 = vector.load %arg5[%c0_14, %c0_15] : memref<1x128xf32, #tpu.memory_space<vmem>>, vector<1x128xf32>
    %36 = vector.broadcast %35 : vector<1x128xf32> to vector<16x128xf32>
    %37 = arith.addf %34, %36 : vector<16x128xf32>
    %38 = arith.addf %0, %37 : vector<16x128xf32>
    %c0_16 = arith.constant 0 : index
    %c0_17 = arith.constant 0 : index
    %39 = vector.load %arg6[%c0_16, %c0_17] : memref<16x128xf32, #tpu.memory_space<vmem>>, vector<16x128xf32>
    tpu.vector_store %arg6[%c0_16, %c0_17], %38 {strides = array<i32>} : memref<16x128xf32, #tpu.memory_space<vmem>>, vector<16x128xf32>,
    return
  }
  func.func @transform_0(%arg0: i32) -> (i32, i32) {
    %c0_i32 = arith.constant 0 : i32
    %c0_i32_0 = arith.constant 0 : i32
    return %arg0, %c0_i32 : i32, i32
  }
  func.func @transform_1(%arg0: i32) -> (i32, i32) {
    %c0_i32 = arith.constant 0 : i32
    %c0_i32_0 = arith.constant 0 : i32
    %c0_i32_1 = arith.constant 0 : i32
    return %c0_i32, %c0_i32_0 : i32, i32
  }
  func.func @transform_2(%arg0: i32) -> (i32, i32) {
    %c0_i32 = arith.constant 0 : i32
    %c0_i32_0 = arith.constant 0 : i32
    %c0_i32_1 = arith.constant 0 : i32
    return %c0_i32, %c0_i32_0 : i32, i32
  }
  func.func @transform_3(%arg0: i32) -> (i32, i32) {
    %c0_i32 = arith.constant 0 : i32
    %c0_i32_0 = arith.constant 0 : i32
    %c0_i32_1 = arith.constant 0 : i32
    return %c0_i32, %c0_i32_0 : i32, i32
  }
  func.func @transform_4(%arg0: i32) -> (i32, i32) {
    %c0_i32 = arith.constant 0 : i32
    %c0_i32_0 = arith.constant 0 : i32
    %c0_i32_1 = arith.constant 0 : i32
    return %c0_i32, %c0_i32_0 : i32, i32
  }
  func.func @transform_5(%arg0: i32) -> (i32, i32) {
    %c0_i32 = arith.constant 0 : i32
    %c0_i32_0 = arith.constant 0 : i32
    return %arg0, %c0_i32 : i32, i32
  }
}

</mosaic_0001>

<llo_original>
// kernel: tpu_custom_call.1
$region0: #{tpu_custom_call.1}
  #allocation0 [shape = 'u32[]', space=smem, size = 0x4, offset = 0x4, fixed_abs, tag = 'smem constant byte address 0x4 - core index']
  #allocation1 [shape = 'u32[144,128]{1,0:T(1,128)}', space=vmem, size = 0x12000, scoped, tag = 'internal scratch']
  %s0 = inlined_call_operand.hbm [shape: f32[16,128], index: 0, kind: input, shape index: {}]
  %s1 = inlined_call_operand.vmem [shape: f32[1,128], index: 1, kind: input, shape index: {}]
  %s2 = inlined_call_operand.vmem [shape: f32[1,128], index: 2, kind: input, shape index: {}]
  %s3 = inlined_call_operand.hbm [shape: bf16[128,128], index: 3, kind: input, shape index: {}]
  %s4 = inlined_call_operand.vmem [shape: f32[1,128], index: 4, kind: input, shape index: {}]
  %s5 = inlined_call_operand.hbm [shape: f32[16,128], index: 5, kind: output, shape index: {}]
  %s6 = sld [smem:[#allocation0]]
  $region38: #{tpu_custom_call.1} parent=0
    _
  %s8 = ssub.s32 1, %s6
  %s9 = scalar_select 0, %s8, %s6
  $region1: #{tpu_custom_call.1} parent=0
    #allocation2 [shape = 'u8[8192]{0}', space=vmem, size = 0x2000, scoped, tag = 'input window, operand 0, single buffered']
    #allocation3 [shape = 's32[1]{0}', space=sflag, size = 0x4, scoped, tag = 'scoped memory for tpu_custom_call.1']
    #allocation4 [shape = 's32[1]{0}', space=sflag, size = 0x4, scoped, tag = 'scoped memory for tpu_custom_call.1']
    #allocation5 [shape = 'u8[32768]{0}', space=vmem, size = 0x8000, scoped, tag = 'input window, operand 3, single buffered']
    #allocation6 [shape = 's32[1]{0}', space=sflag, size = 0x4, scoped, tag = 'scoped memory for tpu_custom_call.1']
    #allocation7 [shape = 'u8[8192]{0}', space=vmem, size = 0x2000, scoped, tag = 'output window, operand 0, single buffered']
    %10 = vsyncpa [#allocation3], 0
    %11 = vsyncpa [#allocation6], 0
    %12 = vsyncpa [#allocation4], 0
    // Predicated region
    $region2: #{tpu_custom_call.1} parent=1 // pred_check
      _
    $region3: #{tpu_custom_call.1} parent=1 // pred_check_branch
      %14 = sbr.rel (0) target = $region5
    $region4: #{tpu_custom_call.1} parent=1 // pred_region
      %s16 = ssub.s32 256, 256
      %17 = vsyncadd [#allocation3], %s16
      %s18 = sshll.u32 [#allocation2], 4
      %s19 = int_to_ptr.vmem [resolvable:$true] %s18
      %24 = dma.hbm_to_vmem [thread:$0]  %s0, 256, %s19, [#allocation3], 128, 128, 8
    $region5: #{tpu_custom_call.1} parent=1 // pred_fallthru
      _
    // Predicated region
    $region6: #{tpu_custom_call.1} parent=1 // pred_check
      _
    $region7: #{tpu_custom_call.1} parent=1 // pred_check_branch
      %26 = sbr.rel (0) target = $region9
    $region8: #{tpu_custom_call.1} parent=1 // pred_region
      _
    $region9: #{tpu_custom_call.1} parent=1 // pred_fallthru
      _
    // Predicated region
    $region10: #{tpu_custom_call.1} parent=1 // pred_check
      _
    $region11: #{tpu_custom_call.1} parent=1 // pred_check_branch
      %28 = sbr.rel (0) target = $region13
    $region12: #{tpu_custom_call.1} parent=1 // pred_region
      _
    $region13: #{tpu_custom_call.1} parent=1 // pred_fallthru
      _
    // Predicated region
    $region14: #{tpu_custom_call.1} parent=1 // pred_check
      _
    $region15: #{tpu_custom_call.1} parent=1 // pred_check_branch
      %30 = sbr.rel (0) target = $region17
    $region16: #{tpu_custom_call.1} parent=1 // pred_region
      %s32 = ssub.s32 1024, 1024
      %33 = vsyncadd [#allocation6], %s32
      %s34 = sshll.u32 [#allocation5], 4
      %s35 = int_to_ptr.vmem [resolvable:$true] %s34
      %40 = dma.hbm_to_vmem [thread:$0]  %s3, 1024, %s35, [#allocation6], 64, 64, 4
    $region17: #{tpu_custom_call.1} parent=1 // pred_fallthru
      _
    // Predicated region
    $region18: #{tpu_custom_call.1} parent=1 // pred_check
      _
    $region19: #{tpu_custom_call.1} parent=1 // pred_check_branch
      %42 = sbr.rel (0) target = $region21
    $region20: #{tpu_custom_call.1} parent=1 // pred_region
      _
    $region21: #{tpu_custom_call.1} parent=1 // pred_fallthru
      _
    // Predicated region
    $region22: #{tpu_custom_call.1} parent=1 // pred_check
      _
    $region23: #{tpu_custom_call.1} parent=1 // pred_check_branch
      %44 = sbr.rel (0) target = $region25
    $region24: #{tpu_custom_call.1} parent=1 // pred_region
      %45 = dma.done [#allocation3], 256
    $region25: #{tpu_custom_call.1} parent=1 // pred_fallthru
      _
    // Predicated region
    $region26: #{tpu_custom_call.1} parent=1 // pred_check
      _
    $region27: #{tpu_custom_call.1} parent=1 // pred_check_branch
      %47 = sbr.rel (0) target = $region29
    $region28: #{tpu_custom_call.1} parent=1 // pred_region
      %48 = dma.done [#allocation6], 1024
    $region29: #{tpu_custom_call.1} parent=1 // pred_fallthru
      _
    %v50 = vld [vmem:[#allocation2] sm:$0xff]
    %v51 = vld [vmem:[#allocation2 + $0x8] sm:$0xff]
    %52 = vadd.xlane.f32.xlu0 %v50
    %v53 = vpop.xlane.xlu0 %52
    %54 = vadd.xlane.f32.xlu0 %v51
    %v55 = vpop.xlane.xlu0 %54
    %v56 = vmul.f32 %v53, 0.03125
    %v57 = vmul.f32 %v55, 0.03125
    %v58 = vsub.f32 %v50, %v56
    %v59 = vsub.f32 %v51, %v57
    %v60 = vlaneseq
    %v61 = vand.u32 %v60, 127
    %vm62 = vcmp.lt.s32.totalorder %v61, 32
    %v63 = vsel %vm62, 1, 0
    %vm64 = vcmp.eq.s32.totalorder %v63, 1
    %v65 = vsel %vm64, %v58, 0.0
    %v66 = vsel %vm64, %v59, 0.0
    %v67 = vmul.f32 %v65, %v65
    %v68 = vmul.f32 %v66, %v66
    %69 = vadd.xlane.f32.xlu0 %v67
    %v70 = vpop.xlane.xlu0 %69
    %71 = vadd.xlane.f32.xlu0 %v68
    %v72 = vpop.xlane.xlu0 %71
    %v73 = vmul.f32 %v70, 0.032258064
    %v74 = vmul.f32 %v72, 0.032258064
    %v75 = vrsqrt.pop %v73
    %v76 = vmul.f32 %v73, %v75
    %vm77 = vcmp.eq.f32.partialorder %v73, inf
    %v78 = vsel %vm77, %v73, %v76
    %vm79 = vcmp.eq.f32.partialorder %v73, 0.0
    %v80 = vand.u32 %v73, 2147483648
    %v81 = vsel %vm79, %v80, %v78
    %v82 = vrsqrt.pop %v74
    %v83 = vmul.f32 %v74, %v82
    %vm84 = vcmp.eq.f32.partialorder %v74, inf
    %v85 = vsel %vm84, %v74, %v83
    %vm86 = vcmp.eq.f32.partialorder %v74, 0.0
    %v87 = vand.u32 %v74, 2147483648
    %v88 = vsel %vm86, %v87, %v85
    %v89 = vadd.f32 %v81, 1e-06
    %v90 = vadd.f32 %v88, 1e-06
    %v91 = vrcp.pop %v89
    %v92 = vmul.f32 1.0, %v91
    %v93 = vrcp.pop %v90
    %v94 = vmul.f32 1.0, %v93
    %v95 = vld [vmem:[%s1] sm:$0x1]
    %v97 = vlaneseq
    %v98 = vshrl.u32 %v97, 7
    %v99 = vsub.s32 0, %v98
    %v100 = vrot.slane %v95, %v99
    %v102 = vmul.f32 %v100, %v92
    %v103 = vmul.f32 %v100, %v94
    %v104 = vmul.f32 %v65, %v102
    %v105 = vmul.f32 %v66, %v103
    %v106 = vld [vmem:[%s2] sm:$0x1]
    %v108 = vlaneseq
    %v109 = vshrl.u32 %v108, 7
    %v110 = vsub.s32 0, %v109
    %v111 = vrot.slane %v106, %v110
    %v113 = vadd.f32 %v104, %v111
    %v114 = vadd.f32 %v105, %v111
    %v115 = vpack.c.bf16 %v114, %v113
    %v116 = vld [vmem:[#allocation5] sm:$0xf]
    %v117 = vld [vmem:[#allocation5 + $0x4] sm:$0xf]
    %v118 = vld [vmem:[#allocation5 + $0x8] sm:$0xf]
    %v119 = vld [vmem:[#allocation5 + $0xc] sm:$0xf]
    %v120 = vld [vmem:[#allocation5 + $0x10] sm:$0xf]
    %v121 = vld [vmem:[#allocation5 + $0x14] sm:$0xf]
    %v122 = vld [vmem:[#allocation5 + $0x18] sm:$0xf]
    %v123 = vld [vmem:[#allocation5 + $0x1c] sm:$0xf]
    %v124 = vld [vmem:[#allocation5 + $0x20] sm:$0xf]
    %v125 = vld [vmem:[#allocation5 + $0x24] sm:$0xf]
    %v126 = vld [vmem:[#allocation5 + $0x28] sm:$0xf]
    %v127 = vld [vmem:[#allocation5 + $0x2c] sm:$0xf]
    %v128 = vld [vmem:[#allocation5 + $0x30] sm:$0xf]
    %v129 = vld [vmem:[#allocation5 + $0x34] sm:$0xf]
    %v130 = vld [vmem:[#allocation5 + $0x38] sm:$0xf]
    %v131 = vld [vmem:[#allocation5 + $0x3c] sm:$0xf]
    %v132 = vld [vmem:[%s4] sm:$0x1]
    %v134 = vlaneseq
    %v135 = vshrl.u32 %v134, 7
    %v136 = vsub.s32 0, %v135
    %v137 = vrot.slane %v132, %v136
    %v155 = vunpack.c.l.b16 %v116
    %v156 = vunpack.c.l.b16 %v117
    %v157 = vunpack.c.l.b16 %v118
    %v158 = vunpack.c.l.b16 %v119
    %v159 = vunpack.c.l.b16 %v120
    %v160 = vunpack.c.l.b16 %v121
    %v161 = vunpack.c.l.b16 %v122
    %v162 = vunpack.c.l.b16 %v123
    %v163 = vunpack.c.l.b16 %v124
    %v164 = vunpack.c.l.b16 %v125
    %v165 = vunpack.c.l.b16 %v126
    %v166 = vunpack.c.l.b16 %v127
    %v167 = vunpack.c.l.b16 %v128
    %v168 = vunpack.c.l.b16 %v129
    %v169 = vunpack.c.l.b16 %v130
    %v170 = vunpack.c.l.b16 %v131
    %v171 = vpack.c.b16 %v156, %v155
    %v172 = vpack.c.b16 %v158, %v157
    %v173 = vpack.c.b16 %v160, %v159
    %v174 = vpack.c.b16 %v162, %v161
    %v175 = vpack.c.b16 %v164, %v163
    %v176 = vpack.c.b16 %v166, %v165
    %v177 = vpack.c.b16 %v168, %v167
    %v178 = vpack.c.b16 %v170, %v169
    %187 = vmatprep.subr.bf16.mxu0 0
    %188 = vmatpush1.bf16.msra.mxu0 %v171
    %189 = vmatprep.subr.bf16.mxu0 0
    %190 = vmatpush1.bf16.msra.mxu0 %v172
    %191 = vmatprep.subr.bf16.mxu0 0
    %192 = vmatpush1.bf16.msra.mxu0 %v173
    %193 = vmatprep.subr.bf16.mxu0 0
    %194 = vmatpush1.bf16.msra.mxu0 %v174
    %195 = vmatprep.subr.bf16.mxu0 0
    %196 = vmatpush1.bf16.msra.mxu0 %v175
    %197 = vmatprep.subr.bf16.mxu0 0
    %198 = vmatpush1.bf16.msra.mxu0 %v176
    %199 = vmatprep.subr.bf16.mxu0 0
    %200 = vmatpush1.bf16.msra.mxu0 %v177
    %201 = vmatprep.subr.bf16.mxu0 0
    %202 = vmatpush1.bf16.msra.mxu0 %v178
    %203 = vmatprep.subr.bf16.mxu0 0
    %204 = vmatpush1.bf16.msra.mxu0 0
    %205 = vmatprep.subr.bf16.mxu0 0
    %206 = vmatpush1.bf16.msra.mxu0 0
    %207 = vmatprep.subr.bf16.mxu0 0
    %208 = vmatpush1.bf16.msra.mxu0 0
    %209 = vmatprep.subr.bf16.mxu0 0
    %210 = vmatpush1.bf16.msra.mxu0 0
    %211 = vmatprep.subr.bf16.mxu0 0
    %212 = vmatpush1.bf16.msra.mxu0 0
    %213 = vmatprep.subr.bf16.mxu0 0
    %214 = vmatpush1.bf16.msra.mxu0 0
    %215 = vmatprep.subr.bf16.mxu0 0
    %216 = vmatpush1.bf16.msra.mxu0 0
    %217 = vmatprep.subr.bf16.mxu0 0
    %218 = vmatpush1.bf16.msra.mxu0 0
    %219 = vmatprep.mubr.bf16.mxu0 0
    %220 = vmatmul.mubr.bf16.gmra.mrb[0].mxu0 %v115
    %v221 = vpop.f32.mrb[0].mxu0
    %v222 = vadd.f32 %v137, %v221
    %v223 = vpop.f32.mrb[0].mxu0
    %v224 = vpop.f32.mrb[0].mxu0
    %v225 = vadd.f32 %v137, %v224
    %v226 = vpop.f32.mrb[0].mxu0
    %227 = vdwg.mxu0
    %v228 = vadd.f32 %v50, %v222
    %v229 = vadd.f32 %v51, %v225
    %230 = vst [vmem:[#allocation7] sm:$0xff] %v228
    %231 = vst [vmem:[#allocation7 + $0x8] sm:$0xff] %v229
    // Predicated region
    $region30: #{tpu_custom_call.1} parent=1 // pred_check
      _
    $region31: #{tpu_custom_call.1} parent=1 // pred_check_branch
      %233 = sbr.rel (0) target = $region33
    $region32: #{tpu_custom_call.1} parent=1 // pred_region
      %s235 = ssub.s32 256, 256
      %236 = vsyncadd [#allocation4], %s235
      %s237 = sshll.u32 [#allocation7], 4
      %s238 = int_to_ptr.vmem [resolvable:$true] %s237
      %243 = dma.vmem_to_hbm [thread:$0]  %s238, 256, %s5, [#allocation4], 128, 128, 8
    $region33: #{tpu_custom_call.1} parent=1 // pred_fallthru
      _
    // Predicated region
    $region34: #{tpu_custom_call.1} parent=1 // pred_check
      _
    $region35: #{tpu_custom_call.1} parent=1 // pred_check_branch
      %245 = sbr.rel (0) target = $region37
    $region36: #{tpu_custom_call.1} parent=1 // pred_region
      %246 = dma.done [#allocation4], 256
    $region37: #{tpu_custom_call.1} parent=1 // pred_fallthru
      _
    %247 = vsyncpa [#allocation3], 1
    %248 = vsyncpa [#allocation6], 1
    %249 = vsyncpa [#allocation4], 1

// kernel: tpu_custom_call.1
$region0: #{tpu_custom_call.1}
  #allocation0 [shape = 'u32[]', space=smem, size = 0x4, offset = 0x4, fixed_abs, tag = 'smem constant byte address 0x4 - core index']
  #allocation1 [shape = 'u32[144,128]{1,0:T(1,128)}', space=vmem, size = 0x12000, scoped, tag = 'internal scratch']
  %s0 = inlined_call_operand.hbm [shape: f32[16,128], index: 0, kind: input, shape index: {}]
  %s1 = inlined_call_operand.vmem [shape: f32[1,128], index: 1, kind: input, shape index: {}]
  %s2 = inlined_call_operand.vmem [shape: f32[1,128], index: 2, kind: input, shape index: {}]
  %s3 = inlined_call_operand.hbm [shape: bf16[128,128], index: 3, kind: input, shape index: {}]
  %s4 = inlined_call_operand.vmem [shape: f32[1,128], index: 4, kind: input, shape index: {}]
  %s5 = inlined_call_operand.hbm [shape: f32[16,128], index: 5, kind: output, shape index: {}]
  %s6 = sld [smem:[#allocation0]]
  $region38: #{tpu_custom_call.1} parent=0
    _
  %s8 = ssub.s32 1, %s6
  %s9 = scalar_select 0, %s8, %s6
  $region1: #{tpu_custom_call.1} parent=0
    #allocation2 [shape = 'u8[8192]{0}', space=vmem, size = 0x2000, scoped, tag = 'input window, operand 0, single buffered']
    #allocation3 [shape = 's32[1]{0}', space=sflag, size = 0x4, scoped, tag = 'scoped memory for tpu_custom_call.1']
    #allocation4 [shape = 's32[1]{0}', space=sflag, size = 0x4, scoped, tag = 'scoped memory for tpu_custom_call.1']
    #allocation5 [shape = 'u8[32768]{0}', space=vmem, size = 0x8000, scoped, tag = 'input window, operand 3, single buffered']
    #allocation6 [shape = 's32[1]{0}', space=sflag, size = 0x4, scoped, tag = 'scoped memory for tpu_custom_call.1']
    #allocation7 [shape = 'u8[8192]{0}', space=vmem, size = 0x2000, scoped, tag = 'output window, operand 0, single buffered']
    %10 = vsyncpa [#allocation3], 0
    %11 = vsyncpa [#allocation6], 0
    %12 = vsyncpa [#allocation4], 0
    // Predicated region
    $region2: #{tpu_custom_call.1} parent=1 // pred_check
      _
    $region3: #{tpu_custom_call.1} parent=1 // pred_check_branch
      %14 = sbr.rel (0) target = $region5
    $region4: #{tpu_custom_call.1} parent=1 // pred_region
      %s16 = ssub.s32 256, 256
      %17 = vsyncadd [#allocation3], %s16
      %s18 = sshll.u32 [#allocation2], 4
      %s19 = int_to_ptr.vmem [resolvable:$true] %s18
      %24 = dma.hbm_to_vmem [thread:$0]  %s0, 256, %s19, [#allocation3], 128, 128, 8
    $region5: #{tpu_custom_call.1} parent=1 // pred_fallthru
      _
    // Predicated region
    $region6: #{tpu_custom_call.1} parent=1 // pred_check
      _
    $region7: #{tpu_custom_call.1} parent=1 // pred_check_branch
      %26 = sbr.rel (0) target = $region9
    $region8: #{tpu_custom_call.1} parent=1 // pred_region
      _
    $region9: #{tpu_custom_call.1} parent=1 // pred_fallthru
      _
    // Predicated region
    $region10: #{tpu_custom_call.1} parent=1 // pred_check
      _
    $region11: #{tpu_custom_call.1} parent=1 // pred_check_branch
      %28 = sbr.rel (0) target = $region13
    $region12: #{tpu_custom_call.1} parent=1 // pred_region
      _
    $region13: #{tpu_custom_call.1} parent=1 // pred_fallthru
      _
    // Predicated region
    $region14: #{tpu_custom_call.1} parent=1 // pred_check
      _
    $region15: #{tpu_custom_call.1} parent=1 // pred_check_branch
      %30 = sbr.rel (0) target = $region17
    $region16: #{tpu_custom_call.1} parent=1 // pred_region
      %s32 = ssub.s32 1024, 1024
      %33 = vsyncadd [#allocation6], %s32
      %s34 = sshll.u32 [#allocation5], 4
      %s35 = int_to_ptr.vmem [resolvable:$true] %s34
      %40 = dma.hbm_to_vmem [thread:$0]  %s3, 1024, %s35, [#allocation6], 64, 64, 4
    $region17: #{tpu_custom_call.1} parent=1 // pred_fallthru
      _
    // Predicated region
    $region18: #{tpu_custom_call.1} parent=1 // pred_check
      _
    $region19: #{tpu_custom_call.1} parent=1 // pred_check_branch
      %42 = sbr.rel (0) target = $region21
    $region20: #{tpu_custom_call.1} parent=1 // pred_region
      _
    $region21: #{tpu_custom_call.1} parent=1 // pred_fallthru
      _
    // Predicated region
    $region22: #{tpu_custom_call.1} parent=1 // pred_check
      _
    $region23: #{tpu_custom_call.1} parent=1 // pred_check_branch
      %44 = sbr.rel (0) target = $region25
    $region24: #{tpu_custom_call.1} parent=1 // pred_region
      %45 = dma.done [#allocation3], 256
    $region25: #{tpu_custom_call.1} parent=1 // pred_fallthru
      _
    // Predicated region
    $region26: #{tpu_custom_call.1} parent=1 // pred_check
      _
    $region27: #{tpu_custom_call.1} parent=1 // pred_check_branch
      %47 = sbr.rel (0) target = $region29
    $region28: #{tpu_custom_call.1} parent=1 // pred_region
      %48 = dma.done [#allocation6], 1024
    $region29: #{tpu_custom_call.1} parent=1 // pred_fallthru
      _
    %v50 = vld [vmem:[#allocation2] sm:$0xff]
    %v51 = vld [vmem:[#allocation2 + $0x8] sm:$0xff]
    %52 = vadd.xlane.f32.xlu0 %v50
    %v53 = vpop.xlane.xlu0 %52
    %54 = vadd.xlane.f32.xlu0 %v51
    %v55 = vpop.xlane.xlu0 %54
    %v56 = vmul.f32 %v53, 0.03125
    %v57 = vmul.f32 %v55, 0.03125
    %v58 = vsub.f32 %v50, %v56
    %v59 = vsub.f32 %v51, %v57
    %v60 = vlaneseq
    %v61 = vand.u32 %v60, 127
    %vm62 = vcmp.lt.s32.totalorder %v61, 32
    %v63 = vsel %vm62, 1, 0
    %vm64 = vcmp.eq.s32.totalorder %v63, 1
    %v65 = vsel %vm64, %v58, 0.0
    %v66 = vsel %vm64, %v59, 0.0
    %v67 = vmul.f32 %v65, %v65
    %v68 = vmul.f32 %v66, %v66
    %69 = vadd.xlane.f32.xlu0 %v67
    %v70 = vpop.xlane.xlu0 %69
    %71 = vadd.xlane.f32.xlu0 %v68
    %v72 = vpop.xlane.xlu0 %71
    %v73 = vmul.f32 %v70, 0.032258064
    %v74 = vmul.f32 %v72, 0.032258064
    %v75 = vrsqrt.pop %v73
    %v76 = vmul.f32 %v73, %v75
    %vm77 = vcmp.eq.f32.partialorder %v73, inf
    %v78 = vsel %vm77, %v73, %v76
    %vm79 = vcmp.eq.f32.partialorder %v73, 0.0
    %v80 = vand.u32 %v73, 2147483648
    %v81 = vsel %vm79, %v80, %v78
    %v82 = vrsqrt.pop %v74
    %v83 = vmul.f32 %v74, %v82
    %vm84 = vcmp.eq.f32.partialorder %v74, inf
    %v85 = vsel %vm84, %v74, %v83
    %vm86 = vcmp.eq.f32.partialorder %v74, 0.0
    %v87 = vand.u32 %v74, 2147483648
    %v88 = vsel %vm86, %v87, %v85
    %v89 = vadd.f32 %v81, 1e-06
    %v90 = vadd.f32 %v88, 1e-06
    %v91 = vrcp.pop %v89
    %v92 = vmul.f32 1.0, %v91
    %v93 = vrcp.pop %v90
    %v94 = vmul.f32 1.0, %v93
    %v95 = vld [vmem:[%s1] sm:$0x1]
    %v97 = vlaneseq
    %v98 = vshrl.u32 %v97, 7
    %v99 = vsub.s32 0, %v98
    %v100 = vrot.slane %v95, %v99
    %v102 = vmul.f32 %v100, %v92
    %v103 = vmul.f32 %v100, %v94
    %v104 = vmul.f32 %v65, %v102
    %v105 = vmul.f32 %v66, %v103
    %v106 = vld [vmem:[%s2] sm:$0x1]
    %v108 = vlaneseq
    %v109 = vshrl.u32 %v108, 7
    %v110 = vsub.s32 0, %v109
    %v111 = vrot.slane %v106, %v110
    %v113 = vadd.f32 %v104, %v111
    %v114 = vadd.f32 %v105, %v111
    %v115 = vpack.c.bf16 %v114, %v113
    %v116 = vld [vmem:[#allocation5] sm:$0xf]
    %v117 = vld [vmem:[#allocation5 + $0x4] sm:$0xf]
    %v118 = vld [vmem:[#allocation5 + $0x8] sm:$0xf]
    %v119 = vld [vmem:[#allocation5 + $0xc] sm:$0xf]
    %v120 = vld [vmem:[#allocation5 + $0x10] sm:$0xf]
    %v121 = vld [vmem:[#allocation5 + $0x14] sm:$0xf]
    %v122 = vld [vmem:[#allocation5 + $0x18] sm:$0xf]
    %v123 = vld [vmem:[#allocation5 + $0x1c] sm:$0xf]
    %v124 = vld [vmem:[#allocation5 + $0x20] sm:$0xf]
    %v125 = vld [vmem:[#allocation5 + $0x24] sm:$0xf]
    %v126 = vld [vmem:[#allocation5 + $0x28] sm:$0xf]
    %v127 = vld [vmem:[#allocation5 + $0x2c] sm:$0xf]
    %v128 = vld [vmem:[#allocation5 + $0x30] sm:$0xf]
    %v129 = vld [vmem:[#allocation5 + $0x34] sm:$0xf]
    %v130 = vld [vmem:[#allocation5 + $0x38] sm:$0xf]
    %v131 = vld [vmem:[#allocation5 + $0x3c] sm:$0xf]
    %v132 = vld [vmem:[%s4] sm:$0x1]
    %v134 = vlaneseq
    %v135 = vshrl.u32 %v134, 7
    %v136 = vsub.s32 0, %v135
    %v137 = vrot.slane %v132, %v136
    %v155 = vunpack.c.l.b16 %v116
    %v156 = vunpack.c.l.b16 %v117
    %v157 = vunpack.c.l.b16 %v118
    %v158 = vunpack.c.l.b16 %v119
    %v159 = vunpack.c.l.b16 %v120
    %v160 = vunpack.c.l.b16 %v121
    %v161 = vunpack.c.l.b16 %v122
    %v162 = vunpack.c.l.b16 %v123
    %v163 = vunpack.c.l.b16 %v124
    %v164 = vunpack.c.l.b16 %v125
    %v165 = vunpack.c.l.b16 %v126
    %v166 = vunpack.c.l.b16 %v127
    %v167 = vunpack.c.l.b16 %v128
    %v168 = vunpack.c.l.b16 %v129
    %v169 = vunpack.c.l.b16 %v130
    %v170 = vunpack.c.l.b16 %v131
    %v171 = vpack.c.b16 %v156, %v155
    %v172 = vpack.c.b16 %v158, %v157
    %v173 = vpack.c.b16 %v160, %v159
    %v174 = vpack.c.b16 %v162, %v161
    %v175 = vpack.c.b16 %v164, %v163
    %v176 = vpack.c.b16 %v166, %v165
    %v177 = vpack.c.b16 %v168, %v167
    %v178 = vpack.c.b16 %v170, %v169
    %187 = vmatprep.subr.bf16.mxu0 0
    %188 = vmatpush1.bf16.msra.mxu0 %v171
    %189 = vmatprep.subr.bf16.mxu0 0
    %190 = vmatpush1.bf16.msra.mxu0 %v172
    %191 = vmatprep.subr.bf16.mxu0 0
    %192 = vmatpush1.bf16.msra.mxu0 %v173
    %193 = vmatprep.subr.bf16.mxu0 0
    %194 = vmatpush1.bf16.msra.mxu0 %v174
    %195 = vmatprep.subr.bf16.mxu0 0
    %196 = vmatpush1.bf16.msra.mxu0 %v175
    %197 = vmatprep.subr.bf16.mxu0 0
    %198 = vmatpush1.bf16.msra.mxu0 %v176
    %199 = vmatprep.subr.bf16.mxu0 0
    %200 = vmatpush1.bf16.msra.mxu0 %v177
    %201 = vmatprep.subr.bf16.mxu0 0
    %202 = vmatpush1.bf16.msra.mxu0 %v178
    %203 = vmatprep.subr.bf16.mxu0 0
    %204 = vmatpush1.bf16.msra.mxu0 0
    %205 = vmatprep.subr.bf16.mxu0 0
    %206 = vmatpush1.bf16.msra.mxu0 0
    %207 = vmatprep.subr.bf16.mxu0 0
    %208 = vmatpush1.bf16.msra.mxu0 0
    %209 = vmatprep.subr.bf16.mxu0 0
    %210 = vmatpush1.bf16.msra.mxu0 0
    %211 = vmatprep.subr.bf16.mxu0 0
    %212 = vmatpush1.bf16.msra.mxu0 0
    %213 = vmatprep.subr.bf16.mxu0 0
    %214 = vmatpush1.bf16.msra.mxu0 0
    %215 = vmatprep.subr.bf16.mxu0 0
    %216 = vmatpush1.bf16.msra.mxu0 0
    %217 = vmatprep.subr.bf16.mxu0 0
    %218 = vmatpush1.bf16.msra.mxu0 0
    %219 = vmatprep.mubr.bf16.mxu0 0
    %220 = vmatmul.mubr.bf16.gmra.mrb[0].mxu0 %v115
    %v221 = vpop.f32.mrb[0].mxu0
    %v222 = vadd.f32 %v137, %v221
    %v223 = vpop.f32.mrb[0].mxu0
    %v224 = vpop.f32.mrb[0].mxu0
    %v225 = vadd.f32 %v137, %v224
    %v226 = vpop.f32.mrb[0].mxu0
    %227 = vdwg.mxu0
    %v228 = vadd.f32 %v50, %v222
    %v229 = vadd.f32 %v51, %v225
    %230 = vst [vmem:[#allocation7] sm:$0xff] %v228
    %231 = vst [vmem:[#allocation7 + $0x8] sm:$0xff] %v229
    // Predicated region
    $region30: #{tpu_custom_call.1} parent=1 // pred_check
      _
    $region31: #{tpu_custom_call.1} parent=1 // pred_check_branch
      %233 = sbr.rel (0) target = $region33
    $region32: #{tpu_custom_call.1} parent=1 // pred_region
      %s235 = ssub.s32 256, 256
      %236 = vsyncadd [#allocation4], %s235
      %s237 = sshll.u32 [#allocation7], 4
      %s238 = int_to_ptr.vmem [resolvable:$true] %s237
      %243 = dma.vmem_to_hbm [thread:$0]  %s238, 256, %s5, [#allocation4], 128, 128, 8
    $region33: #{tpu_custom_call.1} parent=1 // pred_fallthru
      _
    // Predicated region
    $region34: #{tpu_custom_call.1} parent=1 // pred_check
      _
    $region35: #{tpu_custom_call.1} parent=1 // pred_check_branch
      %245 = sbr.rel (0) target = $region37
    $region36: #{tpu_custom_call.1} parent=1 // pred_region
      %246 = dma.done [#allocation4], 256
    $region37: #{tpu_custom_call.1} parent=1 // pred_fallthru
      _
    %247 = vsyncpa [#allocation3], 1
    %248 = vsyncpa [#allocation6], 1
    %249 = vsyncpa [#allocation4], 1

</llo_original>
